<compile_context>
chip_gen: v6e
topology: v6e:2x2x1
jax: 0.10.0
libtpu: 0.0.40
codegen_flags: <defaults>
</compile_context>

<pallas_src>
import functools

import jax
import jax.numpy as jnp
from jax.experimental import pallas as pl
from jax.experimental.pallas import tpu as pltpu


STATE_SIZE = 24
HIDDEN = 64
ACTION_SIZE = 5
ACTION_PAD = 128   # lane width of the second matmul (weights zero-padded; exact)


def _compute_q_act(x_ref, w1_ref, b1_ref, w2_ref, b2_ref):
    """Shared body: returns (q_f32 (TB, ACTION_PAD), act_i32 (TB, 1))."""
    x = x_ref[...]                                             # bf16 (TB, 24)
    h = jnp.dot(x, w1_ref[...],
                preferred_element_type=jnp.float32) + b1_ref[...]
    h = jnp.maximum(h, 0.0)                                    # ReLU on f32 acc
    q = jnp.dot(h.astype(jnp.bfloat16), w2_ref[...],
                preferred_element_type=jnp.float32) + b2_ref[...]

    # Fused greedy action over the real (unpadded) actions; min-lane tie-break
    # matches jnp.argmax's first-index semantics.
    lane = jax.lax.broadcasted_iota(jnp.int32, q.shape, 1)
    valid = lane < ACTION_SIZE
    q_masked = jnp.where(valid, q, -jnp.inf)
    q_max = jnp.max(q_masked, axis=-1, keepdims=True)
    idx = jnp.where((q_masked == q_max) & valid, lane, ACTION_PAD)
    act = jnp.min(idx, axis=-1, keepdims=True).astype(jnp.int32)
    return q, act


def dqn_kernel(x_ref, w1_ref, b1_ref, w2_ref, b2_ref, q_ref, act_ref):
    q, act = _compute_q_act(x_ref, w1_ref, b1_ref, w2_ref, b2_ref)
    # Only the 5 real Q values per row go to HBM (narrow masked store, tiny).
    q_ref[...] = q[:, :ACTION_SIZE].astype(q_ref.dtype)
    act_ref[...] = act


def dqn_act_kernel(x_ref, w1_ref, b1_ref, w2_ref, b2_ref, act_ref):
    # Acting path: no Q writeback at all.
    _, act = _compute_q_act(x_ref, w1_ref, b1_ref, w2_ref, b2_ref)
    act_ref[...] = act


def prepare_params(w1, b1, w2, b2):
    """One-time parameter prep (pad + bf16 cast); cache/reuse across calls."""
    w1p = jnp.asarray(w1, jnp.float32).astype(jnp.bfloat16)             # (24, 64)
    b1p = jnp.asarray(b1, jnp.float32).reshape(1, HIDDEN)               # (1, 64) f32
    w2p = (jnp.zeros((HIDDEN, ACTION_PAD), jnp.float32)
           .at[:, :ACTION_SIZE].set(jnp.asarray(w2, jnp.float32))
           .astype(jnp.bfloat16))                                       # (64, 128)
    b2p = (jnp.zeros((1, ACTION_PAD), jnp.float32)
           .at[0, :ACTION_SIZE].set(jnp.asarray(b2, jnp.float32)
                                    .reshape(ACTION_SIZE)))             # (1, 128) f32
    return w1p, b1p, w2p, b2p


@functools.partial(jax.jit, static_argnames=("return_q", "max_block_b"))
def dqn_forward(x, params, *, return_q=True, max_block_b=4096):
    """Batched DQN forward.

    x: (B, STATE_SIZE) or flat (STATE_SIZE,) (treated as B=1, mirroring the
       PyTorch module's reshape((1, state_size))).
    params: output of prepare_params().
    Returns (q, action) if return_q else action only.
      q: (B, ACTION_SIZE) float32; action: (B,) int32.
    """
    w1p, b1p, w2p, b2p = params
    x = jnp.asarray(x, jnp.float32)
    if x.ndim == 1:
        x = x.reshape(1, STATE_SIZE)
    B = x.shape[0]

    # Single block for small/medium B (no grid-step overhead); cap at 4096
    # rows (~a few MB of VMEM even double-buffered, safe on v5e/v6e/v7x).
    block_b = min(max_block_b, max(8, pl.cdiv(B, 8) * 8))
    nb = pl.cdiv(B, block_b)
    b_pad = nb * block_b
    if b_pad != B:
        x = jnp.pad(x, ((0, b_pad - B), (0, 0)))
    x = x.astype(jnp.bfloat16)

    in_specs = [
        pl.BlockSpec((block_b, STATE_SIZE), lambda i: (i, 0)),
        # Constant block index -> weights/biases stay VMEM-resident across tiles.
        pl.BlockSpec((STATE_SIZE, HIDDEN), lambda i: (0, 0)),
        pl.BlockSpec((1, HIDDEN), lambda i: (0, 0)),
        pl.BlockSpec((HIDDEN, ACTION_PAD), lambda i: (0, 0)),
        pl.BlockSpec((1, ACTION_PAD), lambda i: (0, 0)),
    ]
    cparams = pltpu.CompilerParams(dimension_semantics=("parallel",))

    if return_q:
        q, act = pl.pallas_call(
            dqn_kernel,
            out_shape=(
                jax.ShapeDtypeStruct((b_pad, ACTION_SIZE), jnp.float32),
                jax.ShapeDtypeStruct((b_pad, 1), jnp.int32),
            ),
            grid=(nb,),
            in_specs=in_specs,
            out_specs=(
                pl.BlockSpec((block_b, ACTION_SIZE), lambda i: (i, 0)),
                pl.BlockSpec((block_b, 1), lambda i: (i, 0)),
            ),
            compiler_params=cparams,
        )(x, w1p, b1p, w2p, b2p)
        return q[:B], act[:B, 0]

    act = pl.pallas_call(
        dqn_act_kernel,
        out_shape=jax.ShapeDtypeStruct((b_pad, 1), jnp.int32),
        grid=(nb,),
        in_specs=in_specs,
        out_specs=pl.BlockSpec((block_b, 1), lambda i: (i, 0)),
        compiler_params=cparams,
    )(x, w1p, b1p, w2p, b2p)
    return act[:B, 0]


def init_params(key):
    # Deterministic init mimicking PyTorch's default Linear init:
    # uniform(-1/sqrt(fan_in), 1/sqrt(fan_in)).
    k1, k2, k3, k4 = jax.random.split(key, 4)
    bound1 = 1.0 / jnp.sqrt(jnp.float32(STATE_SIZE))
    bound2 = 1.0 / jnp.sqrt(jnp.float32(HIDDEN))
    w1 = jax.random.uniform(k1, (STATE_SIZE, HIDDEN), jnp.float32, -bound1, bound1)
    b1 = jax.random.uniform(k2, (HIDDEN,), jnp.float32, -bound1, bound1)
    w2 = jax.random.uniform(k3, (HIDDEN, ACTION_SIZE), jnp.float32, -bound2, bound2)
    b2 = jax.random.uniform(k4, (ACTION_SIZE,), jnp.float32, -bound2, bound2)
    return w1, b1, w2, b2


if __name__ == "__main__":
    key = jax.random.PRNGKey(0)
    pkey, xkey = jax.random.split(key)
    w1, b1, w2, b2 = init_params(pkey)
    params = prepare_params(w1, b1, w2, b2)   # one-time prep, reused below

    # Small batched inference (single batch tile, no grid overhead).
    B = 16
    xb = jax.random.normal(xkey, (B, STATE_SIZE), jnp.float32)

    q, act = dqn_forward(xb, params)
    q, act = jax.block_until_ready((q, act))

    # Pure-JAX f32 reference (per-row semantics of the PyTorch module).
    ref_q = jnp.maximum(xb @ w1 + b1, 0.0) @ w2 + b2
    assert q.shape == (B, ACTION_SIZE)
    assert act.shape == (B,)
    # bf16 inputs/weights -> ~1e-3..1e-2 relative error vs the exact f32 ref.
    assert jnp.allclose(q, ref_q, atol=3e-2, rtol=3e-2), (q[:2], ref_q[:2])
    # Fused argmax must be self-consistent with the kernel's own Q-values.
    assert jnp.array_equal(act, jnp.argmax(q, axis=-1).astype(act.dtype))

    # Acting path: actions only, no Q writeback.
    act_only = jax.block_until_ready(dqn_forward(xb, params, return_q=False))
    assert jnp.array_equal(act_only, act)

    # Original-module path: a single flat state vector (B=1 after reshape).
    q1, act1 = dqn_forward(xb[0], params)
    q1 = jax.block_until_ready(q1)
    assert q1.shape == (1, ACTION_SIZE)
    assert jnp.allclose(q1, ref_q[0:1], atol=3e-2, rtol=3e-2), (q1, ref_q[0:1])

    print("KERNEL_OK")
</pallas_src>

<mosaic_0001>
module attributes {stable_mosaic.version = 11 : i64} {
  func.func @dqn_kernel(%arg0: i32, %arg1: memref<16x24xbf16, #tpu.memory_space<vmem>>, %arg2: memref<24x64xbf16, #tpu.memory_space<vmem>>, %arg3: memref<1x64xf32, #tpu.memory_space<vmem>>, %arg4: memref<64x128xbf16, #tpu.memory_space<vmem>>, %arg5: memref<1x128xf32, #tpu.memory_space<vmem>>, %arg6: memref<16x5xf32, #tpu.memory_space<vmem>>, %arg7: memref<16x1xi32, #tpu.memory_space<vmem>>) attributes {dimension_semantics = [#tpu.dimension_semantics<parallel>], iteration_bounds = array<i64: 1>, scalar_prefetch = 0 : i64, scratch_operands = 0 : i64, tpu.core_type = #tpu.core_type<tc>, window_params = [{transform_indices = @transform_0, window_bounds = array<i64: 16, 24>}, {pipeline_mode = #tpu.pipeline_mode<synchronous>, transform_indices = @transform_1, window_bounds = array<i64: 24, 64>}, {pipeline_mode = #tpu.pipeline_mode<synchronous>, transform_indices = @transform_2, window_bounds = array<i64: 1, 64>}, {pipeline_mode = #tpu.pipeline_mode<synchronous>, transform_indices = @transform_3, window_bounds = array<i64: 64, 128>}, {pipeline_mode = #tpu.pipeline_mode<synchronous>, transform_indices = @transform_4, window_bounds = array<i64: 1, 128>}, {transform_indices = @transform_5, window_bounds = array<i64: 16, 5>}, {transform_indices = @transform_6, window_bounds = array<i64: 16, 1>}]} {
    %c0 = arith.constant 0 : index
    %c0_0 = arith.constant 0 : index
    %0 = vector.load %arg1[%c0, %c0_0] : memref<16x24xbf16, #tpu.memory_space<vmem>>, vector<16x24xbf16>
    %c0_1 = arith.constant 0 : index
    %c0_2 = arith.constant 0 : index
    %1 = vector.load %arg2[%c0_1, %c0_2] : memref<24x64xbf16, #tpu.memory_space<vmem>>, vector<24x64xbf16>
    %cst = arith.constant dense<0.000000e+00> : vector<16x64xf32>
    %2 = tpu.matmul %0, %1, %cst {dimension_numbers = #tpu.dot_dimension_numbers<[1], [0], [0], [1], [0, 0, 1, 1], [], []>} : vector<16x24xbf16>, vector<24x64xbf16>, vector<16x64xf32> -> vector<16x64xf32>
    %c0_3 = arith.constant 0 : index
    %c0_4 = arith.constant 0 : index
    %3 = vector.load %arg3[%c0_3, %c0_4] : memref<1x64xf32, #tpu.memory_space<vmem>>, vector<1x64xf32>
    %4 = vector.broadcast %3 : vector<1x64xf32> to vector<16x64xf32>
    %5 = arith.addf %2, %4 : vector<16x64xf32>
    %cst_5 = arith.constant 0.000000e+00 : f32
    %6 = vector.broadcast %cst_5 : f32 to vector<16x64xf32>
    %7 = arith.maximumf %5, %6 : vector<16x64xf32>
    %8 = arith.truncf %7 : vector<16x64xf32> to vector<16x64xbf16>
    %c0_6 = arith.constant 0 : index
    %c0_7 = arith.constant 0 : index
    %9 = vector.load %arg4[%c0_6, %c0_7] : memref<64x128xbf16, #tpu.memory_space<vmem>>, vector<64x128xbf16>
    %cst_8 = arith.constant dense<0.000000e+00> : vector<16x128xf32>
    %10 = tpu.matmul %8, %9, %cst_8 {dimension_numbers = #tpu.dot_dimension_numbers<[1], [0], [0], [1], [0, 0, 1, 1], [], []>} : vector<16x64xbf16>, vector<64x128xbf16>, vector<16x128xf32> -> vector<16x128xf32>
    %c0_9 = arith.constant 0 : index
    %c0_10 = arith.constant 0 : index
    %11 = vector.load %arg5[%c0_9, %c0_10] : memref<1x128xf32, #tpu.memory_space<vmem>>, vector<1x128xf32>
    %12 = vector.broadcast %11 : vector<1x128xf32> to vector<16x128xf32>
    %13 = arith.addf %10, %12 : vector<16x128xf32>
    %14 = tpu.iota {dimensions = array<i32: 1>} : vector<16x128xi32>
    %c5_i32 = arith.constant 5 : i32
    %15 = vector.broadcast %c5_i32 : i32 to vector<16x128xi32>
    %16 = arith.cmpi slt, %14, %15 : vector<16x128xi32>
    %cst_11 = arith.constant 0xFF800000 : f32
    %17 = vector.broadcast %cst_11 : f32 to vector<16x128xf32>
    %18 = arith.select %16, %13, %17 : vector<16x128xi1>, vector<16x128xf32>
    %cst_12 = arith.constant dense<0xFF800000> : vector<16xf32>
    %19 = vector.multi_reduction <maximumf>, %18, %cst_12 [1] : vector<16x128xf32> to vector<16xf32>
    %20 = vector.shape_cast %19 : vector<16xf32> to vector<16x1xf32>
    %21 = vector.broadcast %20 : vector<16x1xf32> to vector<16x128xf32>
    %22 = arith.cmpf oeq, %18, %21 : vector<16x128xf32>
    %23 = arith.andi %22, %16 : vector<16x128xi1>
    %c128_i32 = arith.constant 128 : i32
    %24 = vector.broadcast %c128_i32 : i32 to vector<16x128xi32>
    %25 = arith.select %23, %14, %24 : vector<16x128xi1>, vector<16x128xi32>
    %cst_13 = arith.constant dense<2147483647> : vector<16xi32>
    %26 = vector.multi_reduction <minsi>, %25, %cst_13 [1] : vector<16x128xi32> to vector<16xi32>
    %27 = vector.shape_cast %26 : vector<16xi32> to vector<16x1xi32>
    %28 = vector.extract_strided_slice %13 {offsets = [0, 0], sizes = [16, 5], strides = [1, 1]} : vector<16x128xf32> to vector<16x5xf32>
    %c0_14 = arith.constant 0 : index
    %c0_15 = arith.constant 0 : index
    %29 = vector.load %arg6[%c0_14, %c0_15] : memref<16x5xf32, #tpu.memory_space<vmem>>, vector<16x5xf32>
    tpu.vector_store %arg6[%c0_14, %c0_15], %28 {strides = array<i32>} : memref<16x5xf32, #tpu.memory_space<vmem>>, vector<16x5xf32>,
    %c0_16 = arith.constant 0 : index
    %c0_17 = arith.constant 0 : index
    %30 = vector.load %arg7[%c0_16, %c0_17] : memref<16x1xi32, #tpu.memory_space<vmem>>, vector<16x1xi32>
    tpu.vector_store %arg7[%c0_16, %c0_17], %27 {strides = array<i32>} : memref<16x1xi32, #tpu.memory_space<vmem>>, vector<16x1xi32>,
    return
  }
  func.func @transform_0(%arg0: i32) -> (i32, i32) {
    %c0_i32 = arith.constant 0 : i32
    %c0_i32_0 = arith.constant 0 : i32
    return %arg0, %c0_i32 : i32, i32
  }
  func.func @transform_1(%arg0: i32) -> (i32, i32) {
    %c0_i32 = arith.constant 0 : i32
    %c0_i32_0 = arith.constant 0 : i32
    %c0_i32_1 = arith.constant 0 : i32
    return %c0_i32, %c0_i32_0 : i32, i32
  }
  func.func @transform_2(%arg0: i32) -> (i32, i32) {
    %c0_i32 = arith.constant 0 : i32
    %c0_i32_0 = arith.constant 0 : i32
    %c0_i32_1 = arith.constant 0 : i32
    return %c0_i32, %c0_i32_0 : i32, i32
  }
  func.func @transform_3(%arg0: i32) -> (i32, i32) {
    %c0_i32 = arith.constant 0 : i32
    %c0_i32_0 = arith.constant 0 : i32
    %c0_i32_1 = arith.constant 0 : i32
    return %c0_i32, %c0_i32_0 : i32, i32
  }
  func.func @transform_4(%arg0: i32) -> (i32, i32) {
    %c0_i32 = arith.constant 0 : i32
    %c0_i32_0 = arith.constant 0 : i32
    %c0_i32_1 = arith.constant 0 : i32
    return %c0_i32, %c0_i32_0 : i32, i32
  }
  func.func @transform_5(%arg0: i32) -> (i32, i32) {
    %c0_i32 = arith.constant 0 : i32
    %c0_i32_0 = arith.constant 0 : i32
    return %arg0, %c0_i32 : i32, i32
  }
  func.func @transform_6(%arg0: i32) -> (i32, i32) {
    %c0_i32 = arith.constant 0 : i32
    %c0_i32_0 = arith.constant 0 : i32
    return %arg0, %c0_i32 : i32, i32
  }
}

</mosaic_0001>

<llo_original>
// kernel: dqn_forward.1
$region0: #{dqn_forward.1}
  #allocation0 [shape = 'u32[]', space=smem, size = 0x4, offset = 0x4, fixed_abs, tag = 'smem constant byte address 0x4 - core index']
  #allocation1 [shape = 'u32[144,128]{1,0:T(1,128)}', space=vmem, size = 0x12000, scoped, tag = 'internal scratch']
  %s0 = inlined_call_operand.vmem [shape: bf16[16,24], index: 0, kind: input, shape index: {}]
  %s1 = inlined_call_operand.vmem [shape: bf16[24,64], index: 1, kind: input, shape index: {}]
  %s2 = inlined_call_operand.vmem [shape: f32[1,64], index: 2, kind: input, shape index: {}]
  %s3 = inlined_call_operand.hbm [shape: bf16[64,128], index: 3, kind: input, shape index: {}]
  %s4 = inlined_call_operand.vmem [shape: f32[1,128], index: 4, kind: input, shape index: {}]
  %s5 = inlined_call_operand.vmem [shape: f32[16,5], index: 5, kind: output, shape index: {0}]
  %s6 = inlined_call_operand.vmem [shape: s32[16,1], index: 6, kind: output, shape index: {1}]
  %7 = xla_tuple %s5, %s6
  %s8 = sld [smem:[#allocation0]]
  $region42: #{dqn_forward.1} parent=0
    _
  %s10 = ssub.s32 1, %s8
  %s11 = scalar_select 0, %s10, %s8
  $region1: #{dqn_forward.1} parent=0
    #allocation2 [shape = 'u8[16384]{0}', space=vmem, size = 0x4000, scoped, tag = 'input window, operand 3, single buffered']
    #allocation3 [shape = 's32[1]{0}', space=sflag, size = 0x4, scoped, tag = 'scoped memory for dqn_forward.1']
    %12 = vsyncpa [#allocation3], 0
    // Predicated region
    $region2: #{dqn_forward.1} parent=1 // pred_check
      _
    $region3: #{dqn_forward.1} parent=1 // pred_check_branch
      %14 = sbr.rel (0) target = $region5
    $region4: #{dqn_forward.1} parent=1 // pred_region
      _
    $region5: #{dqn_forward.1} parent=1 // pred_fallthru
      _
    // Predicated region
    $region6: #{dqn_forward.1} parent=1 // pred_check
      _
    $region7: #{dqn_forward.1} parent=1 // pred_check_branch
      %16 = sbr.rel (0) target = $region9
    $region8: #{dqn_forward.1} parent=1 // pred_region
      _
    $region9: #{dqn_forward.1} parent=1 // pred_fallthru
      _
    // Predicated region
    $region10: #{dqn_forward.1} parent=1 // pred_check
      _
    $region11: #{dqn_forward.1} parent=1 // pred_check_branch
      %18 = sbr.rel (0) target = $region13
    $region12: #{dqn_forward.1} parent=1 // pred_region
      _
    $region13: #{dqn_forward.1} parent=1 // pred_fallthru
      _
    // Predicated region
    $region14: #{dqn_forward.1} parent=1 // pred_check
      _
    $region15: #{dqn_forward.1} parent=1 // pred_check_branch
      %20 = sbr.rel (0) target = $region17
    $region16: #{dqn_forward.1} parent=1 // pred_region
      %s22 = ssub.s32 512, 512
      %23 = vsyncadd [#allocation3], %s22
      %s24 = sshll.u32 [#allocation2], 4
      %s25 = int_to_ptr.vmem [resolvable:$true] %s24
      %30 = dma.hbm_to_vmem [thread:$0]  %s3, 512, %s25, [#allocation3], 64, 64, 4
    $region17: #{dqn_forward.1} parent=1 // pred_fallthru
      _
    // Predicated region
    $region18: #{dqn_forward.1} parent=1 // pred_check
      _
    $region19: #{dqn_forward.1} parent=1 // pred_check_branch
      %32 = sbr.rel (0) target = $region21
    $region20: #{dqn_forward.1} parent=1 // pred_region
      _
    $region21: #{dqn_forward.1} parent=1 // pred_fallthru
      _
    // Predicated region
    $region22: #{dqn_forward.1} parent=1 // pred_check
      _
    $region23: #{dqn_forward.1} parent=1 // pred_check_branch
      %34 = sbr.rel (0) target = $region25
    $region24: #{dqn_forward.1} parent=1 // pred_region
      %35 = dma.done [#allocation3], 512
    $region25: #{dqn_forward.1} parent=1 // pred_fallthru
      _
    %v37 = vld [vmem:[%s0] sm:$0xf]
    %v38 = vld [vmem:[%s0 + $0x4] sm:$0xf]
    %v39 = vld [vmem:[%s1] sm:$0xf]
    %v40 = vld [vmem:[%s1 + $0x4] sm:$0xf]
    %v41 = vld [vmem:[%s1 + $0x8] sm:$0xf]
    %v42 = vld [vmem:[%s2] sm:$0x1]
    %v44 = vlaneseq
    %v45 = vshrl.u32 %v44, 7
    %v46 = vsub.s32 0, %v45
    %v47 = vrot.slane %v42, %v46
    %v51 = vunpack.c.l.b16 %v37
    %v52 = vunpack.c.l.b16 %v38
    %v53 = vpack.c.b16 %v52, %v51
    %v57 = vunpack.c.l.b16 %v39
    %v58 = vunpack.c.l.b16 %v40
    %v59 = vunpack.c.l.b16 %v41
    %v60 = vpack.c.b16 %v58, %v57
    %v61 = vpack.c.b16 %v59, %v59
    %vm63 = vcmask 195584
    %v65 = vsel %vm63, %v53, 0
    %vm67 = vcmask 1043456
    %v69 = vsel %vm67, %v61, 0
    %71 = vmatprep.subr.bf16.mxu0 0
    %72 = vmatpush1.bf16.msra.mxu0 0
    %73 = vmatprep.subr.bf16.mxu0 0
    %74 = vmatpush1.bf16.msra.mxu0 0
    %75 = vmatprep.subr.bf16.mxu0 0
    %76 = vmatpush1.bf16.msra.mxu0 0
    %77 = vmatprep.subr.bf16.mxu0 0
    %78 = vmatpush1.bf16.msra.mxu0 0
    %79 = vmatprep.subr.bf16.mxu0 0
    %80 = vmatpush1.bf16.msra.mxu0 0
    %81 = vmatprep.subr.bf16.mxu0 0
    %82 = vmatpush1.bf16.msra.mxu0 0
    %83 = vmatprep.subr.bf16.mxu0 0
    %84 = vmatpush1.bf16.msra.mxu0 %v69
    %85 = vmatprep.subr.bf16.mxu0 0
    %86 = vmatpush1.bf16.msra.mxu0 %v60
    %87 = vmatprep.subr.bf16.mxu0 0
    %88 = vmatpush2.bf16.msra.mxu0 0
    %89 = vmatprep.subr.bf16.mxu0 0
    %90 = vmatpush2.bf16.msra.mxu0 0
    %91 = vmatprep.subr.bf16.mxu0 0
    %92 = vmatpush2.bf16.msra.mxu0 0
    %93 = vmatprep.subr.bf16.mxu0 0
    %94 = vmatpush2.bf16.msra.mxu0 0
    %95 = vmatprep.subr.bf16.mxu0 0
    %96 = vmatpush2.bf16.msra.mxu0 0
    %97 = vmatprep.subr.bf16.mxu0 0
    %98 = vmatpush2.bf16.msra.mxu0 0
    %99 = vmatprep.subr.bf16.mxu0 0
    %100 = vmatpush2.bf16.msra.mxu0 0
    %101 = vmatprep.subr.bf16.mxu0 0
    %102 = vmatpush2.bf16.msra.mxu0 0
    %103 = vmatprep.mubr.bf16.mxu0 0
    %104 = vmatmul.mubr.bf16.gmra.mxu0 %v65
    %v105 = vpop.f32.mrf.mxu0
    %v106 = vadd.f32 %v47, %v105
    %v107 = vpop.f32.mrf.mxu0
    %v108 = vpop.f32.mrf.mxu0
    %v109 = vadd.f32 %v47, %v108
    %v110 = vpop.f32.mrf.mxu0
    %111 = vdwg.mxu0
    %v112 = vmax.f32 %v106, 0.0
    %v113 = vmax.f32 %v109, 0.0
    %v114 = vpack.c.bf16 %v113, %v112
    %v115 = vld [vmem:[#allocation2] sm:$0xf]
    %v116 = vld [vmem:[#allocation2 + $0x4] sm:$0xf]
    %v117 = vld [vmem:[#allocation2 + $0x8] sm:$0xf]
    %v118 = vld [vmem:[#allocation2 + $0xc] sm:$0xf]
    %v119 = vld [vmem:[#allocation2 + $0x10] sm:$0xf]
    %v120 = vld [vmem:[#allocation2 + $0x14] sm:$0xf]
    %v121 = vld [vmem:[#allocation2 + $0x18] sm:$0xf]
    %v122 = vld [vmem:[#allocation2 + $0x1c] sm:$0xf]
    %v123 = vld [vmem:[%s4] sm:$0x1]
    %v125 = vlaneseq
    %v126 = vshrl.u32 %v125, 7
    %v127 = vsub.s32 0, %v126
    %v128 = vrot.slane %v123, %v127
    %v138 = vunpack.c.l.b16 %v115
    %v139 = vunpack.c.l.b16 %v116
    %v140 = vunpack.c.l.b16 %v117
    %v141 = vunpack.c.l.b16 %v118
    %v142 = vunpack.c.l.b16 %v119
    %v143 = vunpack.c.l.b16 %v120
    %v144 = vunpack.c.l.b16 %v121
    %v145 = vunpack.c.l.b16 %v122
    %v146 = vpack.c.b16 %v139, %v138
    %v147 = vpack.c.b16 %v141, %v140
    %v148 = vpack.c.b16 %v143, %v142
    %v149 = vpack.c.b16 %v145, %v144
    %vm154 = vcmask 523264
    %v156 = vsel %vm154, %v114, 0
    %158 = vmatprep.subr.bf16.mxu0 0
    %159 = vmatpush1.bf16.msra.mxu0 0
    %160 = vmatprep.subr.bf16.mxu0 0
    %161 = vmatpush1.bf16.msra.mxu0 0
    %162 = vmatprep.subr.bf16.mxu0 0
    %163 = vmatpush1.bf16.msra.mxu0 0
    %164 = vmatprep.subr.bf16.mxu0 0
    %165 = vmatpush1.bf16.msra.mxu0 0
    %166 = vmatprep.subr.bf16.mxu0 0
    %167 = vmatpush1.bf16.msra.mxu0 %v149
    %168 = vmatprep.subr.bf16.mxu0 0
    %169 = vmatpush1.bf16.msra.mxu0 %v148
    %170 = vmatprep.subr.bf16.mxu0 0
    %171 = vmatpush1.bf16.msra.mxu0 %v147
    %172 = vmatprep.subr.bf16.mxu0 0
    %173 = vmatpush1.bf16.msra.mxu0 %v146
    %174 = vmatprep.subr.bf16.mxu0 0
    %175 = vmatpush2.bf16.msra.mxu0 0
    %176 = vmatprep.subr.bf16.mxu0 0
    %177 = vmatpush2.bf16.msra.mxu0 0
    %178 = vmatprep.subr.bf16.mxu0 0
    %179 = vmatpush2.bf16.msra.mxu0 0
    %180 = vmatprep.subr.bf16.mxu0 0
    %181 = vmatpush2.bf16.msra.mxu0 0
    %182 = vmatprep.subr.bf16.mxu0 0
    %183 = vmatpush2.bf16.msra.mxu0 0
    %184 = vmatprep.subr.bf16.mxu0 0
    %185 = vmatpush2.bf16.msra.mxu0 0
    %186 = vmatprep.subr.bf16.mxu0 0
    %187 = vmatpush2.bf16.msra.mxu0 0
    %188 = vmatprep.subr.bf16.mxu0 0
    %189 = vmatpush2.bf16.msra.mxu0 0
    %190 = vmatprep.mubr.bf16.mxu0 0
    %191 = vmatmul.mubr.bf16.gmra.mxu0 %v156
    %v192 = vpop.f32.mrf.mxu0
    %v193 = vadd.f32 %v128, %v192
    %v194 = vpop.f32.mrf.mxu0
    %v195 = vpop.f32.mrf.mxu0
    %v196 = vadd.f32 %v128, %v195
    %v197 = vpop.f32.mrf.mxu0
    %198 = vdwg.mxu0
    %v199 = vlaneseq
    %v200 = vand.u32 %v199, 127
    %vm201 = vcmp.lt.s32.totalorder %v200, 5
    %v202 = vsel %vm201, %v193, -inf
    %v203 = vsel %vm201, %v196, -inf
    %204 = vmax.xlane.f32.xlu0 %v202
    %v205 = vpop.xlane.xlu0 %204
    %206 = vmax.xlane.f32.xlu0 %v203
    %v207 = vpop.xlane.xlu0 %206
    %vm208 = vcmp.eq.f32.partialorder %v202, %v205
    %vm209 = vcmp.eq.f32.partialorder %v203, %v207
    %vm210 = vmand %vm208, %vm201
    %vm211 = vmand %vm209, %vm201
    %v212 = vsel %vm210, %v200, 128
    %v213 = vsel %vm211, %v200, 128
    %v214 = vand.u32 %v212, 65535
    %v215 = vshra.s32 %v212, 16
    %v216 = vcvt.s32.f32 %v214
    %v217 = vcvt.s32.f32 %v215
    %218 = vmin.xlane.f32.xlu0 %v217
    %v219 = vpop.xlane.xlu0 %218
    %vm220 = vcmp.eq.f32.partialorder %v217, %v219
    %v221 = vsel %vm220, %v216, inf
    %222 = vmin.xlane.f32.xlu0 %v221
    %v223 = vpop.xlane.xlu0 %222
    %v224 = vcvt.f32.s32 %v223
    %v225 = vcvt.f32.s32 %v219
    %v226 = vshll.u32 %v225, 16
    %v227 = vadd.s32 %v226, %v224
    %v228 = vand.u32 %v213, 65535
    %v229 = vshra.s32 %v213, 16
    %v230 = vcvt.s32.f32 %v228
    %v231 = vcvt.s32.f32 %v229
    %232 = vmin.xlane.f32.xlu0 %v231
    %v233 = vpop.xlane.xlu0 %232
    %vm234 = vcmp.eq.f32.partialorder %v231, %v233
    %v235 = vsel %vm234, %v230, inf
    %236 = vmin.xlane.f32.xlu0 %v235
    %v237 = vpop.xlane.xlu0 %236
    %v238 = vcvt.f32.s32 %v237
    %v239 = vcvt.f32.s32 %v233
    %v240 = vshll.u32 %v239, 16
    %v241 = vadd.s32 %v240, %v238
    %vm242 = vcmask 39936
    %243 = vst.msk [vmem:[%s5] sm:$0xff] %vm242, %v193
    %244 = vst.msk [vmem:[%s5 + $0x8] sm:$0xff] %vm242, %v196
    %vm245 = vcmask 7168
    %246 = vst.msk [vmem:[%s6] sm:$0xff] %vm245, %v227
    %247 = vst.msk [vmem:[%s6 + $0x8] sm:$0xff] %vm245, %v241
    // Predicated region
    $region26: #{dqn_forward.1} parent=1 // pred_check
      _
    $region27: #{dqn_forward.1} parent=1 // pred_check_branch
      %249 = sbr.rel (0) target = $region29
    $region28: #{dqn_forward.1} parent=1 // pred_region
      _
    $region29: #{dqn_forward.1} parent=1 // pred_fallthru
      _
    // Predicated region
    $region30: #{dqn_forward.1} parent=1 // pred_check
      _
    $region31: #{dqn_forward.1} parent=1 // pred_check_branch
      %251 = sbr.rel (0) target = $region33
    $region32: #{dqn_forward.1} parent=1 // pred_region
      _
    $region33: #{dqn_forward.1} parent=1 // pred_fallthru
      _
    // Predicated region
    $region34: #{dqn_forward.1} parent=1 // pred_check
      _
    $region35: #{dqn_forward.1} parent=1 // pred_check_branch
      %253 = sbr.rel (0) target = $region37
    $region36: #{dqn_forward.1} parent=1 // pred_region
      _
    $region37: #{dqn_forward.1} parent=1 // pred_fallthru
      _
    // Predicated region
    $region38: #{dqn_forward.1} parent=1 // pred_check
      _
    $region39: #{dqn_forward.1} parent=1 // pred_check_branch
      %255 = sbr.rel (0) target = $region41
    $region40: #{dqn_forward.1} parent=1 // pred_region
      _
    $region41: #{dqn_forward.1} parent=1 // pred_fallthru
      _
    %256 = vsyncpa [#allocation3], 1

</llo_original>
